<compile_context>
chip_gen: v7x
topology: tpu7x:2x2x1
jax: 0.10.0
libtpu: 0.0.40
codegen_flags: <defaults>
</compile_context>

<pallas_src>
import jax
import jax.numpy as jnp
from jax import lax
from jax.experimental import pallas as pl
from jax.experimental.pallas import tpu as pltpu


def _make_double_conv_kernel(W: int, pad: int):
    """Fused (conv3x3 -> BN -> ReLU) x 2 kernel for one batch element.

    Layout inside the kernel: activations are (C, H*W) with channels on sublanes
    and the flattened spatial dim on lanes.  `pad` is a lane-aligned zero margin
    on both sides of the spatial axis so every 3x3 tap is a static lane shift,
    with zero fill providing the top/bottom row halo.
    """
    margin = W + 1  # max |dy*W + dx| actually read by the 9 taps

    def kernel(x_ref, cml_ref, cmh_ref,
               w1_ref, s1_ref, b1_ref,
               w2_ref, s2_ref, b2_ref,
               o_ref,
               pad1_ref, col1_ref, pad2_ref, col2_ref):
        hw = o_ref.shape[-1]
        cm_lo = cml_ref[...]   # (1, HW) bf16, 0.0 where out-col == 0      (dx = -1 wrap)
        cm_hi = cmh_ref[...]   # (1, HW) bf16, 0.0 where out-col == W - 1  (dx = +1 wrap)

        def conv_bn_relu(pad_ref, col_ref, center, w_ref, s_ref, b_ref):
            c_in = pad_ref.shape[0]

            # Zero only the `margin` lanes the taps actually read (not the full
            # lane-aligned PAD).  Done every step: batch axis is "parallel", so an
            # init-once pattern keyed on program_id==0 is not safe across cores.
            z = jnp.zeros((c_in, margin), pad_ref.dtype)
            pad_ref[:, pad - margin:pad] = z
            pad_ref[:, pad + hw:pad + hw + margin] = z
            # Interior fill (lane-aligned store, strictly within [pad, pad+hw)).
            pad_ref[:, pad:pad + hw] = center
            xp = pad_ref[...]                     # (c_in, hw + 2*pad) bf16

            # im2col on sublanes: stacked (9*c_in, hw) operand.  Each tap is a
            # static lane shift of the zero-margined buffer (row halo = zero fill);
            # the column-wrap masks are folded directly into the copy.
            for k in range(9):                    # fully unrolled 3x3 taps
                ky, kx = divmod(k, 3)
                dy, dx = ky - 1, kx - 1
                shift = dy * W + dx
                xs = xp[:, pad + shift:pad + shift + hw]
                if dx == -1:
                    xs = xs * cm_lo
                elif dx == 1:
                    xs = xs * cm_hi
                col_ref[k * c_in:(k + 1) * c_in, :] = xs

            # Single MXU matmul per layer: (c_out, 9*c_in) x (9*c_in, hw) -> f32.
            acc = jnp.dot(w_ref[...], col_ref[...],
                          preferred_element_type=jnp.float32)
            # Fused inference BatchNorm (per-channel scale/shift) + ReLU in f32.
            return jnp.maximum(acc * s_ref[...] + b_ref[...], 0.0)

        # f32 input from HBM, cast to bf16 in VMEM (halves input HBM traffic vs a
        # wrapper-side cast pass).
        x_bf16 = x_ref[0].astype(jnp.bfloat16)
        y1 = conv_bn_relu(pad1_ref, col1_ref, x_bf16, w1_ref, s1_ref, b1_ref)
        # Mid activation stays in VMEM (bf16) -> no HBM round-trip between layers.
        y2 = conv_bn_relu(pad2_ref, col2_ref, y1.astype(jnp.bfloat16),
                          w2_ref, s2_ref, b2_ref)
        o_ref[0] = y2

    return kernel


def double_conv_up(x_nchw, params, eps=1e-5):
    """DoubleConv_up forward. Input/output are NCHW f32 (PyTorch convention)."""
    N, Cin, H, W = x_nchw.shape
    p1, p2 = params
    Cmid = p1["w"].shape[-1]
    Cout = p2["w"].shape[-1]
    HW = H * W
    PAD = ((W + 1 + 127) // 128) * 128      # lane-aligned margin (>= W+1)

    def fold(p):
        cin, cout = p["w"].shape[2], p["w"].shape[3]
        scale = p["gamma"] / jnp.sqrt(p["var"] + eps)
        shift = p["beta"] - p["mean"] * scale
        # (3,3,cin,cout) HWIO -> (cout, 9*cin): column index = k*cin + ci, matching
        # the stacked im2col operand, so the whole 3x3 conv is ONE MXU matmul.
        w2d = jnp.transpose(p["w"].reshape(9, cin, cout), (2, 0, 1)).reshape(cout, 9 * cin)
        return (w2d.astype(jnp.bfloat16),
                scale.reshape(cout, 1).astype(jnp.float32),
                shift.reshape(cout, 1).astype(jnp.float32))

    w1, s1, b1 = fold(p1)
    w2, s2, b2 = fold(p2)

    # NCHW -> (N, C, H*W) is a free reshape; stays f32 (kernel casts in VMEM).
    xf = x_nchw.reshape(N, Cin, HW)

    # Precomputed 0/1 column-edge masks in destination coordinates (exact in bf16).
    col = jnp.arange(HW, dtype=jnp.int32) % W
    cm_lo = (col >= 1).astype(jnp.bfloat16).reshape(1, HW)
    cm_hi = (col <= W - 2).astype(jnp.bfloat16).reshape(1, HW)

    # VMEM budget: line buffers + im2col scratch + double-buffered I/O + weights.
    scratch_bytes = ((Cin + Cmid) * (HW + 2 * PAD) * 2
                     + 9 * (Cin + Cmid) * HW * 2)
    io_bytes = 2 * (Cin * HW * 4 + Cout * HW * 4)
    w_bytes = 2 * ((Cmid * 9 * Cin + Cout * 9 * Cmid) * 2
                   + 2 * HW * 2 + (Cmid + Cout) * 2 * 4)
    vmem_limit = int(min(max(2 * (scratch_bytes + io_bytes + w_bytes),
                             16 * 1024 * 1024), 48 * 1024 * 1024))

    kernel = _make_double_conv_kernel(W, PAD)
    out = pl.pallas_call(
        kernel,
        out_shape=jax.ShapeDtypeStruct((N, Cout, HW), jnp.float32),
        grid_spec=pltpu.PrefetchScalarGridSpec(
            num_scalar_prefetch=0,
            grid=(N,),
            in_specs=[
                pl.BlockSpec((1, Cin, HW), lambda n: (n, 0, 0)),       # x (f32)
                pl.BlockSpec((1, HW), lambda n: (0, 0)),               # cm_lo
                pl.BlockSpec((1, HW), lambda n: (0, 0)),               # cm_hi
                pl.BlockSpec((Cmid, 9 * Cin), lambda n: (0, 0)),       # w1 (Cout x 9Cin)
                pl.BlockSpec((Cmid, 1), lambda n: (0, 0)),             # scale1
                pl.BlockSpec((Cmid, 1), lambda n: (0, 0)),             # shift1
                pl.BlockSpec((Cout, 9 * Cmid), lambda n: (0, 0)),      # w2
                pl.BlockSpec((Cout, 1), lambda n: (0, 0)),             # scale2
                pl.BlockSpec((Cout, 1), lambda n: (0, 0)),             # shift2
            ],
            # Lane-dense output: last dim = H*W (multiple of 128) -> unmasked stores.
            out_specs=pl.BlockSpec((1, Cout, HW), lambda n: (n, 0, 0)),
            scratch_shapes=[
                pltpu.VMEM((Cin, HW + 2 * PAD), jnp.bfloat16),    # layer-1 line buffer
                pltpu.VMEM((9 * Cin, HW), jnp.bfloat16),          # layer-1 im2col stack
                pltpu.VMEM((Cmid, HW + 2 * PAD), jnp.bfloat16),   # layer-2 line buffer
                pltpu.VMEM((9 * Cmid, HW), jnp.bfloat16),         # layer-2 im2col stack
            ],
        ),
        compiler_params=pltpu.CompilerParams(
            dimension_semantics=("parallel",),
            vmem_limit_bytes=vmem_limit,
        ),
    )(xf, cm_lo, cm_hi, w1, s1, b1, w2, s2, b2)

    return out.reshape(N, Cout, H, W)


def make_params(key, in_channels, mid_channels, out_channels):
    ks = jax.random.split(key, 8)

    def block(kw, kg, kb, km, cin, cout):
        return {
            "w": 0.1 * jax.random.normal(kw, (3, 3, cin, cout), jnp.float32),
            "gamma": 1.0 + 0.1 * jax.random.normal(kg, (cout,), jnp.float32),
            "beta": 0.1 * jax.random.normal(kb, (cout,), jnp.float32),
            "mean": 0.1 * jax.random.normal(km, (cout,), jnp.float32),
            "var": jnp.ones((cout,), jnp.float32) * 0.5,
        }

    return [
        block(ks[0], ks[1], ks[2], ks[3], in_channels, mid_channels),
        block(ks[4], ks[5], ks[6], ks[7], mid_channels, out_channels),
    ]


def _reference(x_nchw, params, eps=1e-5):
    """Pure-JAX reference mirroring the kernel numerics (bf16 feed, f32 accumulate)."""
    x = x_nchw
    for p in params:
        scale = p["gamma"] / jnp.sqrt(p["var"] + eps)
        shift = p["beta"] - p["mean"] * scale
        w = jnp.transpose(p["w"], (3, 2, 0, 1)).astype(jnp.bfloat16)  # HWIO -> OIHW
        y = lax.conv_general_dilated(
            x.astype(jnp.bfloat16), w, window_strides=(1, 1),
            padding=((1, 1), (1, 1)),
            dimension_numbers=("NCHW", "OIHW", "NCHW"),
            preferred_element_type=jnp.float32)
        x = jnp.maximum(y * scale.reshape(1, -1, 1, 1) + shift.reshape(1, -1, 1, 1),
                        0.0)
    return x


if __name__ == "__main__":
    key = jax.random.PRNGKey(0)
    k_x, k_p = jax.random.split(key)

    N, Cin, H, W = 2, 4, 16, 16
    Cmid = Cout = 8

    x = jax.random.normal(k_x, (N, Cin, H, W), jnp.float32)  # NCHW, like PyTorch
    params = make_params(k_p, Cin, Cmid, Cout)

    out = double_conv_up(x, params)
    out = jax.block_until_ready(out)

    ref = _reference(x, params)
    assert out.shape == (N, Cout, H, W)
    # Tolerance accounts for the bf16 MXU feed (inputs/weights/mid activation in bf16,
    # f32 accumulation); both kernel and reference use the same quantization points.
    assert jnp.allclose(out, ref, atol=2e-2, rtol=2e-2)

    print("KERNEL_OK")
</pallas_src>

<mosaic_0001>
module attributes {stable_mosaic.version = 11 : i64} {
  func.func @kernel(%arg0: i32, %arg1: memref<1x4x256xf32, #tpu.memory_space<vmem>>, %arg2: memref<1x256xbf16, #tpu.memory_space<vmem>>, %arg3: memref<1x256xbf16, #tpu.memory_space<vmem>>, %arg4: memref<8x36xbf16, #tpu.memory_space<vmem>>, %arg5: memref<8x1xf32, #tpu.memory_space<vmem>>, %arg6: memref<8x1xf32, #tpu.memory_space<vmem>>, %arg7: memref<8x72xbf16, #tpu.memory_space<vmem>>, %arg8: memref<8x1xf32, #tpu.memory_space<vmem>>, %arg9: memref<8x1xf32, #tpu.memory_space<vmem>>, %arg10: memref<1x8x256xf32, #tpu.memory_space<vmem>>, %arg11: memref<4x512xbf16, #tpu.memory_space<vmem>>, %arg12: memref<36x256xbf16, #tpu.memory_space<vmem>>, %arg13: memref<8x512xbf16, #tpu.memory_space<vmem>>, %arg14: memref<72x256xbf16, #tpu.memory_space<vmem>>) attributes {dimension_semantics = [#tpu.dimension_semantics<parallel>], iteration_bounds = array<i64: 2>, scalar_prefetch = 0 : i64, scratch_operands = 4 : i64, tpu.core_type = #tpu.core_type<tc>, window_params = [{transform_indices = @transform_0, window_bounds = array<i64: 1, 4, 256>}, {pipeline_mode = #tpu.pipeline_mode<synchronous>, transform_indices = @transform_1, window_bounds = array<i64: 1, 256>}, {pipeline_mode = #tpu.pipeline_mode<synchronous>, transform_indices = @transform_2, window_bounds = array<i64: 1, 256>}, {pipeline_mode = #tpu.pipeline_mode<synchronous>, transform_indices = @transform_3, window_bounds = array<i64: 8, 36>}, {pipeline_mode = #tpu.pipeline_mode<synchronous>, transform_indices = @transform_4, window_bounds = array<i64: 8, 1>}, {pipeline_mode = #tpu.pipeline_mode<synchronous>, transform_indices = @transform_5, window_bounds = array<i64: 8, 1>}, {pipeline_mode = #tpu.pipeline_mode<synchronous>, transform_indices = @transform_6, window_bounds = array<i64: 8, 72>}, {pipeline_mode = #tpu.pipeline_mode<synchronous>, transform_indices = @transform_7, window_bounds = array<i64: 8, 1>}, {pipeline_mode = #tpu.pipeline_mode<synchronous>, transform_indices = @transform_8, window_bounds = array<i64: 8, 1>}, {transform_indices = @transform_9, window_bounds = array<i64: 1, 8, 256>}]} {
    %c0 = arith.constant 0 : index
    %c0_0 = arith.constant 0 : index
    %0 = vector.load %arg2[%c0, %c0_0] : memref<1x256xbf16, #tpu.memory_space<vmem>>, vector<1x256xbf16>
    %c0_1 = arith.constant 0 : index
    %c0_2 = arith.constant 0 : index
    %1 = vector.load %arg3[%c0_1, %c0_2] : memref<1x256xbf16, #tpu.memory_space<vmem>>, vector<1x256xbf16>
    %c0_3 = arith.constant 0 : index
    %c0_4 = arith.constant 0 : index
    %c0_5 = arith.constant 0 : index
    %2 = vector.load %arg1[%c0_3, %c0_4, %c0_5] : memref<1x4x256xf32, #tpu.memory_space<vmem>>, vector<1x4x256xf32>
    %3 = vector.shape_cast %2 : vector<1x4x256xf32> to vector<4x256xf32>
    %4 = arith.truncf %3 : vector<4x256xf32> to vector<4x256xbf16>
    %cst = arith.constant 0.000000e+00 : bf16
    %5 = vector.broadcast %cst : bf16 to vector<4x17xbf16>
    %c0_6 = arith.constant 0 : index
    %c111 = arith.constant 111 : index
    %6 = vector.load %arg11[%c0_6, %c111] : memref<4x512xbf16, #tpu.memory_space<vmem>>, vector<4x17xbf16>
    tpu.vector_store %arg11[%c0_6, %c111], %5 {strides = array<i32>} : memref<4x512xbf16, #tpu.memory_space<vmem>>, vector<4x17xbf16>,
    %c0_7 = arith.constant 0 : index
    %c384 = arith.constant 384 : index
    %7 = vector.load %arg11[%c0_7, %c384] : memref<4x512xbf16, #tpu.memory_space<vmem>>, vector<4x17xbf16>
    tpu.vector_store %arg11[%c0_7, %c384], %5 {strides = array<i32>} : memref<4x512xbf16, #tpu.memory_space<vmem>>, vector<4x17xbf16>,
    %c0_8 = arith.constant 0 : index
    %c128 = arith.constant 128 : index
    %8 = vector.load %arg11[%c0_8, %c128] : memref<4x512xbf16, #tpu.memory_space<vmem>>, vector<4x256xbf16>
    tpu.vector_store %arg11[%c0_8, %c128], %4 {strides = array<i32>} : memref<4x512xbf16, #tpu.memory_space<vmem>>, vector<4x256xbf16>,
    %c0_9 = arith.constant 0 : index
    %c0_10 = arith.constant 0 : index
    %9 = vector.load %arg11[%c0_9, %c0_10] : memref<4x512xbf16, #tpu.memory_space<vmem>>, vector<4x512xbf16>
    %10 = vector.extract_strided_slice %9 {offsets = [0, 111], sizes = [4, 256], strides = [1, 1]} : vector<4x512xbf16> to vector<4x256xbf16>
    %11 = vector.broadcast %0 : vector<1x256xbf16> to vector<4x256xbf16>
    %12 = arith.mulf %10, %11 : vector<4x256xbf16>
    %c0_11 = arith.constant 0 : index
    %c0_12 = arith.constant 0 : index
    %13 = vector.load %arg12[%c0_11, %c0_12] : memref<36x256xbf16, #tpu.memory_space<vmem>>, vector<4x256xbf16>
    tpu.vector_store %arg12[%c0_11, %c0_12], %12 {strides = array<i32>} : memref<36x256xbf16, #tpu.memory_space<vmem>>, vector<4x256xbf16>,
    %14 = vector.extract_strided_slice %9 {offsets = [0, 112], sizes = [4, 256], strides = [1, 1]} : vector<4x512xbf16> to vector<4x256xbf16>
    %c4 = arith.constant 4 : index
    %c0_13 = arith.constant 0 : index
    %15 = vector.load %arg12[%c4, %c0_13] : memref<36x256xbf16, #tpu.memory_space<vmem>>, vector<4x256xbf16>
    tpu.vector_store %arg12[%c4, %c0_13], %14 {strides = array<i32>} : memref<36x256xbf16, #tpu.memory_space<vmem>>, vector<4x256xbf16>,
    %16 = vector.extract_strided_slice %9 {offsets = [0, 113], sizes = [4, 256], strides = [1, 1]} : vector<4x512xbf16> to vector<4x256xbf16>
    %17 = vector.broadcast %1 : vector<1x256xbf16> to vector<4x256xbf16>
    %18 = arith.mulf %16, %17 : vector<4x256xbf16>
    %c8 = arith.constant 8 : index
    %c0_14 = arith.constant 0 : index
    %19 = vector.load %arg12[%c8, %c0_14] : memref<36x256xbf16, #tpu.memory_space<vmem>>, vector<4x256xbf16>
    tpu.vector_store %arg12[%c8, %c0_14], %18 {strides = array<i32>} : memref<36x256xbf16, #tpu.memory_space<vmem>>, vector<4x256xbf16>,
    %20 = vector.extract_strided_slice %9 {offsets = [0, 127], sizes = [4, 256], strides = [1, 1]} : vector<4x512xbf16> to vector<4x256xbf16>
    %21 = vector.broadcast %0 : vector<1x256xbf16> to vector<4x256xbf16>
    %22 = arith.mulf %20, %21 : vector<4x256xbf16>
    %c12 = arith.constant 12 : index
    %c0_15 = arith.constant 0 : index
    %23 = vector.load %arg12[%c12, %c0_15] : memref<36x256xbf16, #tpu.memory_space<vmem>>, vector<4x256xbf16>
    tpu.vector_store %arg12[%c12, %c0_15], %22 {strides = array<i32>} : memref<36x256xbf16, #tpu.memory_space<vmem>>, vector<4x256xbf16>,
    %24 = vector.extract_strided_slice %9 {offsets = [0, 128], sizes = [4, 256], strides = [1, 1]} : vector<4x512xbf16> to vector<4x256xbf16>
    %c16 = arith.constant 16 : index
    %c0_16 = arith.constant 0 : index
    %25 = vector.load %arg12[%c16, %c0_16] : memref<36x256xbf16, #tpu.memory_space<vmem>>, vector<4x256xbf16>
    tpu.vector_store %arg12[%c16, %c0_16], %24 {strides = array<i32>} : memref<36x256xbf16, #tpu.memory_space<vmem>>, vector<4x256xbf16>,
    %26 = vector.extract_strided_slice %9 {offsets = [0, 129], sizes = [4, 256], strides = [1, 1]} : vector<4x512xbf16> to vector<4x256xbf16>
    %27 = vector.broadcast %1 : vector<1x256xbf16> to vector<4x256xbf16>
    %28 = arith.mulf %26, %27 : vector<4x256xbf16>
    %c20 = arith.constant 20 : index
    %c0_17 = arith.constant 0 : index
    %29 = vector.load %arg12[%c20, %c0_17] : memref<36x256xbf16, #tpu.memory_space<vmem>>, vector<4x256xbf16>
    tpu.vector_store %arg12[%c20, %c0_17], %28 {strides = array<i32>} : memref<36x256xbf16, #tpu.memory_space<vmem>>, vector<4x256xbf16>,
    %30 = vector.extract_strided_slice %9 {offsets = [0, 143], sizes = [4, 256], strides = [1, 1]} : vector<4x512xbf16> to vector<4x256xbf16>
    %31 = vector.broadcast %0 : vector<1x256xbf16> to vector<4x256xbf16>
    %32 = arith.mulf %30, %31 : vector<4x256xbf16>
    %c24 = arith.constant 24 : index
    %c0_18 = arith.constant 0 : index
    %33 = vector.load %arg12[%c24, %c0_18] : memref<36x256xbf16, #tpu.memory_space<vmem>>, vector<4x256xbf16>
    tpu.vector_store %arg12[%c24, %c0_18], %32 {strides = array<i32>} : memref<36x256xbf16, #tpu.memory_space<vmem>>, vector<4x256xbf16>,
    %34 = vector.extract_strided_slice %9 {offsets = [0, 144], sizes = [4, 256], strides = [1, 1]} : vector<4x512xbf16> to vector<4x256xbf16>
    %c28 = arith.constant 28 : index
    %c0_19 = arith.constant 0 : index
    %35 = vector.load %arg12[%c28, %c0_19] : memref<36x256xbf16, #tpu.memory_space<vmem>>, vector<4x256xbf16>
    tpu.vector_store %arg12[%c28, %c0_19], %34 {strides = array<i32>} : memref<36x256xbf16, #tpu.memory_space<vmem>>, vector<4x256xbf16>,
    %36 = vector.extract_strided_slice %9 {offsets = [0, 145], sizes = [4, 256], strides = [1, 1]} : vector<4x512xbf16> to vector<4x256xbf16>
    %37 = vector.broadcast %1 : vector<1x256xbf16> to vector<4x256xbf16>
    %38 = arith.mulf %36, %37 : vector<4x256xbf16>
    %c32 = arith.constant 32 : index
    %c0_20 = arith.constant 0 : index
    %39 = vector.load %arg12[%c32, %c0_20] : memref<36x256xbf16, #tpu.memory_space<vmem>>, vector<4x256xbf16>
    tpu.vector_store %arg12[%c32, %c0_20], %38 {strides = array<i32>} : memref<36x256xbf16, #tpu.memory_space<vmem>>, vector<4x256xbf16>,
    %c0_21 = arith.constant 0 : index
    %c0_22 = arith.constant 0 : index
    %40 = vector.load %arg4[%c0_21, %c0_22] : memref<8x36xbf16, #tpu.memory_space<vmem>>, vector<8x36xbf16>
    %c0_23 = arith.constant 0 : index
    %c0_24 = arith.constant 0 : index
    %41 = vector.load %arg12[%c0_23, %c0_24] : memref<36x256xbf16, #tpu.memory_space<vmem>>, vector<36x256xbf16>
    %cst_25 = arith.constant dense<0.000000e+00> : vector<8x256xf32>
    %42 = tpu.matmul %40, %41, %cst_25 {dimension_numbers = #tpu.dot_dimension_numbers<[1], [0], [0], [1], [0, 0, 1, 1], [], []>} : vector<8x36xbf16>, vector<36x256xbf16>, vector<8x256xf32> -> vector<8x256xf32>
    %c0_26 = arith.constant 0 : index
    %c0_27 = arith.constant 0 : index
    %43 = vector.load %arg5[%c0_26, %c0_27] : memref<8x1xf32, #tpu.memory_space<vmem>>, vector<8x1xf32>
    %44 = vector.broadcast %43 : vector<8x1xf32> to vector<8x256xf32>
    %45 = arith.mulf %42, %44 : vector<8x256xf32>
    %c0_28 = arith.constant 0 : index
    %c0_29 = arith.constant 0 : index
    %46 = vector.load %arg6[%c0_28, %c0_29] : memref<8x1xf32, #tpu.memory_space<vmem>>, vector<8x1xf32>
    %47 = vector.broadcast %46 : vector<8x1xf32> to vector<8x256xf32>
    %48 = arith.addf %45, %47 : vector<8x256xf32>
    %cst_30 = arith.constant 0.000000e+00 : f32
    %49 = vector.broadcast %cst_30 : f32 to vector<8x256xf32>
    %50 = arith.maximumf %48, %49 : vector<8x256xf32>
    %51 = arith.truncf %50 : vector<8x256xf32> to vector<8x256xbf16>
    %cst_31 = arith.constant 0.000000e+00 : bf16
    %52 = vector.broadcast %cst_31 : bf16 to vector<8x17xbf16>
    %c0_32 = arith.constant 0 : index
    %c111_33 = arith.constant 111 : index
    %53 = vector.load %arg13[%c0_32, %c111_33] : memref<8x512xbf16, #tpu.memory_space<vmem>>, vector<8x17xbf16>
    tpu.vector_store %arg13[%c0_32, %c111_33], %52 {strides = array<i32>} : memref<8x512xbf16, #tpu.memory_space<vmem>>, vector<8x17xbf16>,
    %c0_34 = arith.constant 0 : index
    %c384_35 = arith.constant 384 : index
    %54 = vector.load %arg13[%c0_34, %c384_35] : memref<8x512xbf16, #tpu.memory_space<vmem>>, vector<8x17xbf16>
    tpu.vector_store %arg13[%c0_34, %c384_35], %52 {strides = array<i32>} : memref<8x512xbf16, #tpu.memory_space<vmem>>, vector<8x17xbf16>,
    %c0_36 = arith.constant 0 : index
    %c128_37 = arith.constant 128 : index
    %55 = vector.load %arg13[%c0_36, %c128_37] : memref<8x512xbf16, #tpu.memory_space<vmem>>, vector<8x256xbf16>
    tpu.vector_store %arg13[%c0_36, %c128_37], %51 {strides = array<i32>} : memref<8x512xbf16, #tpu.memory_space<vmem>>, vector<8x256xbf16>,
    %c0_38 = arith.constant 0 : index
    %c0_39 = arith.constant 0 : index
    %56 = vector.load %arg13[%c0_38, %c0_39] : memref<8x512xbf16, #tpu.memory_space<vmem>>, vector<8x512xbf16>
    %57 = vector.extract_strided_slice %56 {offsets = [0, 111], sizes = [8, 256], strides = [1, 1]} : vector<8x512xbf16> to vector<8x256xbf16>
    %58 = vector.broadcast %0 : vector<1x256xbf16> to vector<8x256xbf16>
    %59 = arith.mulf %57, %58 : vector<8x256xbf16>
    %c0_40 = arith.constant 0 : index
    %c0_41 = arith.constant 0 : index
    %60 = vector.load %arg14[%c0_40, %c0_41] : memref<72x256xbf16, #tpu.memory_space<vmem>>, vector<8x256xbf16>
    tpu.vector_store %arg14[%c0_40, %c0_41], %59 {strides = array<i32>} : memref<72x256xbf16, #tpu.memory_space<vmem>>, vector<8x256xbf16>,
    %61 = vector.extract_strided_slice %56 {offsets = [0, 112], sizes = [8, 256], strides = [1, 1]} : vector<8x512xbf16> to vector<8x256xbf16>
    %c8_42 = arith.constant 8 : index
    %c0_43 = arith.constant 0 : index
    %62 = vector.load %arg14[%c8_42, %c0_43] : memref<72x256xbf16, #tpu.memory_space<vmem>>, vector<8x256xbf16>
    tpu.vector_store %arg14[%c8_42, %c0_43], %61 {strides = array<i32>} : memref<72x256xbf16, #tpu.memory_space<vmem>>, vector<8x256xbf16>,
    %63 = vector.extract_strided_slice %56 {offsets = [0, 113], sizes = [8, 256], strides = [1, 1]} : vector<8x512xbf16> to vector<8x256xbf16>
    %64 = vector.broadcast %1 : vector<1x256xbf16> to vector<8x256xbf16>
    %65 = arith.mulf %63, %64 : vector<8x256xbf16>
    %c16_44 = arith.constant 16 : index
    %c0_45 = arith.constant 0 : index
    %66 = vector.load %arg14[%c16_44, %c0_45] : memref<72x256xbf16, #tpu.memory_space<vmem>>, vector<8x256xbf16>
    tpu.vector_store %arg14[%c16_44, %c0_45], %65 {strides = array<i32>} : memref<72x256xbf16, #tpu.memory_space<vmem>>, vector<8x256xbf16>,
    %67 = vector.extract_strided_slice %56 {offsets = [0, 127], sizes = [8, 256], strides = [1, 1]} : vector<8x512xbf16> to vector<8x256xbf16>
    %68 = vector.broadcast %0 : vector<1x256xbf16> to vector<8x256xbf16>
    %69 = arith.mulf %67, %68 : vector<8x256xbf16>
    %c24_46 = arith.constant 24 : index
    %c0_47 = arith.constant 0 : index
    %70 = vector.load %arg14[%c24_46, %c0_47] : memref<72x256xbf16, #tpu.memory_space<vmem>>, vector<8x256xbf16>
    tpu.vector_store %arg14[%c24_46, %c0_47], %69 {strides = array<i32>} : memref<72x256xbf16, #tpu.memory_space<vmem>>, vector<8x256xbf16>,
    %71 = vector.extract_strided_slice %56 {offsets = [0, 128], sizes = [8, 256], strides = [1, 1]} : vector<8x512xbf16> to vector<8x256xbf16>
    %c32_48 = arith.constant 32 : index
    %c0_49 = arith.constant 0 : index
    %72 = vector.load %arg14[%c32_48, %c0_49] : memref<72x256xbf16, #tpu.memory_space<vmem>>, vector<8x256xbf16>
    tpu.vector_store %arg14[%c32_48, %c0_49], %71 {strides = array<i32>} : memref<72x256xbf16, #tpu.memory_space<vmem>>, vector<8x256xbf16>,
    %73 = vector.extract_strided_slice %56 {offsets = [0, 129], sizes = [8, 256], strides = [1, 1]} : vector<8x512xbf16> to vector<8x256xbf16>
    %74 = vector.broadcast %1 : vector<1x256xbf16> to vector<8x256xbf16>
    %75 = arith.mulf %73, %74 : vector<8x256xbf16>
    %c40 = arith.constant 40 : index
    %c0_50 = arith.constant 0 : index
    %76 = vector.load %arg14[%c40, %c0_50] : memref<72x256xbf16, #tpu.memory_space<vmem>>, vector<8x256xbf16>
    tpu.vector_store %arg14[%c40, %c0_50], %75 {strides = array<i32>} : memref<72x256xbf16, #tpu.memory_space<vmem>>, vector<8x256xbf16>,
    %77 = vector.extract_strided_slice %56 {offsets = [0, 143], sizes = [8, 256], strides = [1, 1]} : vector<8x512xbf16> to vector<8x256xbf16>
    %78 = vector.broadcast %0 : vector<1x256xbf16> to vector<8x256xbf16>
    %79 = arith.mulf %77, %78 : vector<8x256xbf16>
    %c48 = arith.constant 48 : index
    %c0_51 = arith.constant 0 : index
    %80 = vector.load %arg14[%c48, %c0_51] : memref<72x256xbf16, #tpu.memory_space<vmem>>, vector<8x256xbf16>
    tpu.vector_store %arg14[%c48, %c0_51], %79 {strides = array<i32>} : memref<72x256xbf16, #tpu.memory_space<vmem>>, vector<8x256xbf16>,
    %81 = vector.extract_strided_slice %56 {offsets = [0, 144], sizes = [8, 256], strides = [1, 1]} : vector<8x512xbf16> to vector<8x256xbf16>
    %c56 = arith.constant 56 : index
    %c0_52 = arith.constant 0 : index
    %82 = vector.load %arg14[%c56, %c0_52] : memref<72x256xbf16, #tpu.memory_space<vmem>>, vector<8x256xbf16>
    tpu.vector_store %arg14[%c56, %c0_52], %81 {strides = array<i32>} : memref<72x256xbf16, #tpu.memory_space<vmem>>, vector<8x256xbf16>,
    %83 = vector.extract_strided_slice %56 {offsets = [0, 145], sizes = [8, 256], strides = [1, 1]} : vector<8x512xbf16> to vector<8x256xbf16>
    %84 = vector.broadcast %1 : vector<1x256xbf16> to vector<8x256xbf16>
    %85 = arith.mulf %83, %84 : vector<8x256xbf16>
    %c64 = arith.constant 64 : index
    %c0_53 = arith.constant 0 : index
    %86 = vector.load %arg14[%c64, %c0_53] : memref<72x256xbf16, #tpu.memory_space<vmem>>, vector<8x256xbf16>
    tpu.vector_store %arg14[%c64, %c0_53], %85 {strides = array<i32>} : memref<72x256xbf16, #tpu.memory_space<vmem>>, vector<8x256xbf16>,
    %c0_54 = arith.constant 0 : index
    %c0_55 = arith.constant 0 : index
    %87 = vector.load %arg7[%c0_54, %c0_55] : memref<8x72xbf16, #tpu.memory_space<vmem>>, vector<8x72xbf16>
    %c0_56 = arith.constant 0 : index
    %c0_57 = arith.constant 0 : index
    %88 = vector.load %arg14[%c0_56, %c0_57] : memref<72x256xbf16, #tpu.memory_space<vmem>>, vector<72x256xbf16>
    %cst_58 = arith.constant dense<0.000000e+00> : vector<8x256xf32>
    %89 = tpu.matmul %87, %88, %cst_58 {dimension_numbers = #tpu.dot_dimension_numbers<[1], [0], [0], [1], [0, 0, 1, 1], [], []>} : vector<8x72xbf16>, vector<72x256xbf16>, vector<8x256xf32> -> vector<8x256xf32>
    %c0_59 = arith.constant 0 : index
    %c0_60 = arith.constant 0 : index
    %90 = vector.load %arg8[%c0_59, %c0_60] : memref<8x1xf32, #tpu.memory_space<vmem>>, vector<8x1xf32>
    %91 = vector.broadcast %90 : vector<8x1xf32> to vector<8x256xf32>
    %92 = arith.mulf %89, %91 : vector<8x256xf32>
    %c0_61 = arith.constant 0 : index
    %c0_62 = arith.constant 0 : index
    %93 = vector.load %arg9[%c0_61, %c0_62] : memref<8x1xf32, #tpu.memory_space<vmem>>, vector<8x1xf32>
    %94 = vector.broadcast %93 : vector<8x1xf32> to vector<8x256xf32>
    %95 = arith.addf %92, %94 : vector<8x256xf32>
    %cst_63 = arith.constant 0.000000e+00 : f32
    %96 = vector.broadcast %cst_63 : f32 to vector<8x256xf32>
    %97 = arith.maximumf %95, %96 : vector<8x256xf32>
    %c0_64 = arith.constant 0 : index
    %c0_65 = arith.constant 0 : index
    %c0_66 = arith.constant 0 : index
    %98 = vector.load %arg10[%c0_64, %c0_65, %c0_66] : memref<1x8x256xf32, #tpu.memory_space<vmem>>, vector<1x8x256xf32>
    %99 = vector.shape_cast %98 : vector<1x8x256xf32> to vector<8x256xf32>
    %100 = vector.shape_cast %97 : vector<8x256xf32> to vector<1x8x256xf32>
    tpu.vector_store %arg10[%c0_64, %c0_65, %c0_66], %100 {strides = array<i32>} : memref<1x8x256xf32, #tpu.memory_space<vmem>>, vector<1x8x256xf32>,
    return
  }
  func.func @transform_0(%arg0: i32) -> (i32, i32, i32) {
    %c0_i32 = arith.constant 0 : i32
    %c0_i32_0 = arith.constant 0 : i32
    %c0_i32_1 = arith.constant 0 : i32
    return %arg0, %c0_i32, %c0_i32_0 : i32, i32, i32
  }
  func.func @transform_1(%arg0: i32) -> (i32, i32) {
    %c0_i32 = arith.constant 0 : i32
    %c0_i32_0 = arith.constant 0 : i32
    %c0_i32_1 = arith.constant 0 : i32
    return %c0_i32, %c0_i32_0 : i32, i32
  }
  func.func @transform_2(%arg0: i32) -> (i32, i32) {
    %c0_i32 = arith.constant 0 : i32
    %c0_i32_0 = arith.constant 0 : i32
    %c0_i32_1 = arith.constant 0 : i32
    return %c0_i32, %c0_i32_0 : i32, i32
  }
  func.func @transform_3(%arg0: i32) -> (i32, i32) {
    %c0_i32 = arith.constant 0 : i32
    %c0_i32_0 = arith.constant 0 : i32
    %c0_i32_1 = arith.constant 0 : i32
    return %c0_i32, %c0_i32_0 : i32, i32
  }
  func.func @transform_4(%arg0: i32) -> (i32, i32) {
    %c0_i32 = arith.constant 0 : i32
    %c0_i32_0 = arith.constant 0 : i32
    %c0_i32_1 = arith.constant 0 : i32
    return %c0_i32, %c0_i32_0 : i32, i32
  }
  func.func @transform_5(%arg0: i32) -> (i32, i32) {
    %c0_i32 = arith.constant 0 : i32
    %c0_i32_0 = arith.constant 0 : i32
    %c0_i32_1 = arith.constant 0 : i32
    return %c0_i32, %c0_i32_0 : i32, i32
  }
  func.func @transform_6(%arg0: i32) -> (i32, i32) {
    %c0_i32 = arith.constant 0 : i32
    %c0_i32_0 = arith.constant 0 : i32
    %c0_i32_1 = arith.constant 0 : i32
    return %c0_i32, %c0_i32_0 : i32, i32
  }
  func.func @transform_7(%arg0: i32) -> (i32, i32) {
    %c0_i32 = arith.constant 0 : i32
    %c0_i32_0 = arith.constant 0 : i32
    %c0_i32_1 = arith.constant 0 : i32
    return %c0_i32, %c0_i32_0 : i32, i32
  }
  func.func @transform_8(%arg0: i32) -> (i32, i32) {
    %c0_i32 = arith.constant 0 : i32
    %c0_i32_0 = arith.constant 0 : i32
    %c0_i32_1 = arith.constant 0 : i32
    return %c0_i32, %c0_i32_0 : i32, i32
  }
  func.func @transform_9(%arg0: i32) -> (i32, i32, i32) {
    %c0_i32 = arith.constant 0 : i32
    %c0_i32_0 = arith.constant 0 : i32
    %c0_i32_1 = arith.constant 0 : i32
    return %arg0, %c0_i32, %c0_i32_0 : i32, i32, i32
  }
}

</mosaic_0001>

<llo_original>
// kernel: tpu_custom_call.1
$region0: #{tpu_custom_call.1}
  #allocation0 [shape = 'u32[]', space=smem, size = 0x4, offset = 0x4, fixed_abs, tag = 'smem constant byte address 0x4 - core index']
  #allocation1 [shape = 'u32[144,128]{1,0:T(1,128)}', space=vmem, size = 0x12000, scoped, tag = 'internal scratch']
  #allocation2 [shape = 'bf16[4,512]{1,0:T(4,128)(2,1)}', space=vmem, size = 0x1000, scoped, tag = 'scratch operand']
  #allocation3 [shape = 'bf16[36,256]{1,0:T(8,128)(2,1)}', space=vmem, size = 0x5000, scoped, tag = 'scratch operand']
  #allocation4 [shape = 'bf16[8,512]{1,0:T(8,128)(2,1)}', space=vmem, size = 0x2000, scoped, tag = 'scratch operand']
  #allocation5 [shape = 'bf16[72,256]{1,0:T(8,128)(2,1)}', space=vmem, size = 0x9000, scoped, tag = 'scratch operand']
  %s0 = inlined_call_operand.vmem [shape: f32[2,4,256], index: 0, kind: input, shape index: {}]
  %s1 = inlined_call_operand.vmem [shape: bf16[1,256], index: 1, kind: input, shape index: {}]
  %s2 = inlined_call_operand.vmem [shape: bf16[1,256], index: 2, kind: input, shape index: {}]
  %s3 = inlined_call_operand.vmem [shape: bf16[8,36], index: 3, kind: input, shape index: {}]
  %s4 = inlined_call_operand.vmem [shape: f32[8,1], index: 4, kind: input, shape index: {}]
  %s5 = inlined_call_operand.vmem [shape: f32[8,1], index: 5, kind: input, shape index: {}]
  %s6 = inlined_call_operand.vmem [shape: bf16[8,72], index: 6, kind: input, shape index: {}]
  %s7 = inlined_call_operand.vmem [shape: f32[8,1], index: 7, kind: input, shape index: {}]
  %s8 = inlined_call_operand.vmem [shape: f32[8,1], index: 8, kind: input, shape index: {}]
  %s9 = inlined_call_operand.hbm [shape: f32[2,8,256], index: 9, kind: output, shape index: {}]
  %s10 = sld [smem:[#allocation0]]
  $region69: #{tpu_custom_call.1} parent=0
    _
  %s12 = ssub.s32 1, %s10
  %s13 = scalar_select 0, %s12, %s10
  $region1: #{tpu_custom_call.1} parent=0
    #allocation6 [shape = 'u8[16384]{0}', space=vmem, size = 0x4000, scoped, tag = 'output window, operand 0']
    #allocation7 [shape = 's32[2]{0}', space=sflag, size = 0x8, scoped, tag = 'scoped memory for tpu_custom_call.1']
    %14 = vsyncpa [#allocation7], 0
    %s15 = scalar_lea.sflag [#allocation7], 1
    %16 = vsyncpa %s15, 0
    loop: start=0, step=1, limit=4
    $region2: #{tpu_custom_call.1} parent=1 // loop_pre_header
      _
    $region3: #{tpu_custom_call.1} parent=1 // loop_header
      %s18 = sphi 0, %s22
      %p19 = scmp.ge.s32.totalorder %s18, 4
      %s28 = sphi 0, %s30
      %s31 = sphi 0, %s28
      %s32 = sphi 0, %s31
      %s48 = sphi 0, %s32
      %s52 = sphi 0, %s52
      %s54 = sphi 0, %s52
      %s55 = sphi 0, %s54
      %s69 = sphi 0, %s55
      %s73 = sphi 0, %s73
      %s75 = sphi 0, %s73
      %s76 = sphi 0, %s75
      %s90 = sphi 0, %s76
      %s94 = sphi 0, %s94
      %s96 = sphi 0, %s94
      %s97 = sphi 0, %s96
      %s111 = sphi 0, %s97
      %s115 = sphi 0, %s115
      %s117 = sphi 0, %s115
      %s118 = sphi 0, %s117
      %s132 = sphi 0, %s118
      %s136 = sphi 0, %s136
      %s138 = sphi 0, %s136
      %s139 = sphi 0, %s138
      %s153 = sphi 0, %s139
      %s157 = sphi 0, %s157
      %s159 = sphi 0, %s157
      %s160 = sphi 0, %s159
      %s174 = sphi 0, %s160
      %s178 = sphi 0, %s178
      %s180 = sphi 0, %s178
      %s181 = sphi 0, %s180
      %s195 = sphi 0, %s181
      %s199 = sphi 0, %s199
      %s201 = sphi 0, %s199
      %s202 = sphi 0, %s201
      %s216 = sphi 0, %s202
      %s222 = sphi 0, %s224
      %s225 = sphi 0, %s222
      %s226 = sphi 0, %s225
      %s242 = sphi 0, %s226
    $region4: #{tpu_custom_call.1} parent=1 // loop_header_branch
      %21 = sbr.rel (%p19) target = $region8
    $region5: #{tpu_custom_call.1} parent=1 // loop_body
      %s23 = ssub.s32 %s18, 1
      %s24 = ssub.s32 %s18, 2
      %s25 = sadd.s32 %s18, 1
      %s26 = ssub.s32 %s18, %s25
      %p27 = scmp.eq.s32.totalorder %s26, 0
      %s29 = sadd.s32 %s28, 1
      %s30 = scalar_select %p27, %s28, %s29
      %p33 = pneg %p27
      %p34 = scmp.eq.s32.totalorder %s18, 1
      %p35 = por %p33, %p34
      %p36 = scmp.ne.s32.totalorder %s28, %s31
      %p37 = scmp.eq.s32.totalorder %s18, 0
      %p38 = por %p36, %p37
      %p39 = scmp.ne.s32.totalorder %s28, %s31
      %p40 = scmp.eq.s32.totalorder %s23, 1
      %p41 = por %p39, %p40
      %p42 = scmp.ne.s32.totalorder %s31, %s32
      %p43 = scmp.eq.s32.totalorder %s23, 0
      %p44 = por %p42, %p43
      %p45 = scmp.ne.s32.totalorder %s31, %s32
      %p46 = scmp.eq.s32.totalorder %s24, 1
      %p47 = por %p45, %p46
      %p49 = scmp.ne.s32.totalorder %s32, %s48
      %p50 = scmp.eq.s32.totalorder %s24, 0
      %p51 = por %p49, %p50
      %s53 = sadd.s32 %s52, 1
      %p56 = scmp.eq.s32.totalorder %s18, 1
      %p57 = scmp.ne.s32.totalorder %s52, %s54
      %p58 = scmp.eq.s32.totalorder %s18, 0
      %p59 = por %p57, %p58
      %p60 = scmp.ne.s32.totalorder %s52, %s54
      %p61 = scmp.eq.s32.totalorder %s23, 1
      %p62 = por %p60, %p61
      %p63 = scmp.ne.s32.totalorder %s54, %s55
      %p64 = scmp.eq.s32.totalorder %s23, 0
      %p65 = por %p63, %p64
      %p66 = scmp.ne.s32.totalorder %s54, %s55
      %p67 = scmp.eq.s32.totalorder %s24, 1
      %p68 = por %p66, %p67
      %p70 = scmp.ne.s32.totalorder %s55, %s69
      %p71 = scmp.eq.s32.totalorder %s24, 0
      %p72 = por %p70, %p71
      %s74 = sadd.s32 %s73, 1
      %p77 = scmp.eq.s32.totalorder %s18, 1
      %p78 = scmp.ne.s32.totalorder %s73, %s75
      %p79 = scmp.eq.s32.totalorder %s18, 0
      %p80 = por %p78, %p79
      %p81 = scmp.ne.s32.totalorder %s73, %s75
      %p82 = scmp.eq.s32.totalorder %s23, 1
      %p83 = por %p81, %p82
      %p84 = scmp.ne.s32.totalorder %s75, %s76
      %p85 = scmp.eq.s32.totalorder %s23, 0
      %p86 = por %p84, %p85
      %p87 = scmp.ne.s32.totalorder %s75, %s76
      %p88 = scmp.eq.s32.totalorder %s24, 1
      %p89 = por %p87, %p88
      %p91 = scmp.ne.s32.totalorder %s76, %s90
      %p92 = scmp.eq.s32.totalorder %s24, 0
      %p93 = por %p91, %p92
      %s95 = sadd.s32 %s94, 1
      %p98 = scmp.eq.s32.totalorder %s18, 1
      %p99 = scmp.ne.s32.totalorder %s94, %s96
      %p100 = scmp.eq.s32.totalorder %s18, 0
      %p101 = por %p99, %p100
      %p102 = scmp.ne.s32.totalorder %s94, %s96
      %p103 = scmp.eq.s32.totalorder %s23, 1
      %p104 = por %p102, %p103
      %p105 = scmp.ne.s32.totalorder %s96, %s97
      %p106 = scmp.eq.s32.totalorder %s23, 0
      %p107 = por %p105, %p106
      %p108 = scmp.ne.s32.totalorder %s96, %s97
      %p109 = scmp.eq.s32.totalorder %s24, 1
      %p110 = por %p108, %p109
      %p112 = scmp.ne.s32.totalorder %s97, %s111
      %p113 = scmp.eq.s32.totalorder %s24, 0
      %p114 = por %p112, %p113
      %s116 = sadd.s32 %s115, 1
      %p119 = scmp.eq.s32.totalorder %s18, 1
      %p120 = scmp.ne.s32.totalorder %s115, %s117
      %p121 = scmp.eq.s32.totalorder %s18, 0
      %p122 = por %p120, %p121
      %p123 = scmp.ne.s32.totalorder %s115, %s117
      %p124 = scmp.eq.s32.totalorder %s23, 1
      %p125 = por %p123, %p124
      %p126 = scmp.ne.s32.totalorder %s117, %s118
      %p127 = scmp.eq.s32.totalorder %s23, 0
      %p128 = por %p126, %p127
      %p129 = scmp.ne.s32.totalorder %s117, %s118
      %p130 = scmp.eq.s32.totalorder %s24, 1
      %p131 = por %p129, %p130
      %p133 = scmp.ne.s32.totalorder %s118, %s132
      %p134 = scmp.eq.s32.totalorder %s24, 0
      %p135 = por %p133, %p134
      %s137 = sadd.s32 %s136, 1
      %p140 = scmp.eq.s32.totalorder %s18, 1
      %p141 = scmp.ne.s32.totalorder %s136, %s138
      %p142 = scmp.eq.s32.totalorder %s18, 0
      %p143 = por %p141, %p142
      %p144 = scmp.ne.s32.totalorder %s136, %s138
      %p145 = scmp.eq.s32.totalorder %s23, 1
      %p146 = por %p144, %p145
      %p147 = scmp.ne.s32.totalorder %s138, %s139
      %p148 = scmp.eq.s32.totalorder %s23, 0
      %p149 = por %p147, %p148
      %p150 = scmp.ne.s32.totalorder %s138, %s139
      %p151 = scmp.eq.s32.totalorder %s24, 1
      %p152 = por %p150, %p151
      %p154 = scmp.ne.s32.totalorder %s139, %s153
      %p155 = scmp.eq.s32.totalorder %s24, 0
      %p156 = por %p154, %p155
      %s158 = sadd.s32 %s157, 1
      %p161 = scmp.eq.s32.totalorder %s18, 1
      %p162 = scmp.ne.s32.totalorder %s157, %s159
      %p163 = scmp.eq.s32.totalorder %s18, 0
      %p164 = por %p162, %p163
      %p165 = scmp.ne.s32.totalorder %s157, %s159
      %p166 = scmp.eq.s32.totalorder %s23, 1
      %p167 = por %p165, %p166
      %p168 = scmp.ne.s32.totalorder %s159, %s160
      %p169 = scmp.eq.s32.totalorder %s23, 0
      %p170 = por %p168, %p169
      %p171 = scmp.ne.s32.totalorder %s159, %s160
      %p172 = scmp.eq.s32.totalorder %s24, 1
      %p173 = por %p171, %p172
      %p175 = scmp.ne.s32.totalorder %s160, %s174
      %p176 = scmp.eq.s32.totalorder %s24, 0
      %p177 = por %p175, %p176
      %s179 = sadd.s32 %s178, 1
      %p182 = scmp.eq.s32.totalorder %s18, 1
      %p183 = scmp.ne.s32.totalorder %s178, %s180
      %p184 = scmp.eq.s32.totalorder %s18, 0
      %p185 = por %p183, %p184
      %p186 = scmp.ne.s32.totalorder %s178, %s180
      %p187 = scmp.eq.s32.totalorder %s23, 1
      %p188 = por %p186, %p187
      %p189 = scmp.ne.s32.totalorder %s180, %s181
      %p190 = scmp.eq.s32.totalorder %s23, 0
      %p191 = por %p189, %p190
      %p192 = scmp.ne.s32.totalorder %s180, %s181
      %p193 = scmp.eq.s32.totalorder %s24, 1
      %p194 = por %p192, %p193
      %p196 = scmp.ne.s32.totalorder %s181, %s195
      %p197 = scmp.eq.s32.totalorder %s24, 0
      %p198 = por %p196, %p197
      %s200 = sadd.s32 %s199, 1
      %p203 = scmp.eq.s32.totalorder %s18, 1
      %p204 = scmp.ne.s32.totalorder %s199, %s201
      %p205 = scmp.eq.s32.totalorder %s18, 0
      %p206 = por %p204, %p205
      %p207 = scmp.ne.s32.totalorder %s199, %s201
      %p208 = scmp.eq.s32.totalorder %s23, 1
      %p209 = por %p207, %p208
      %p210 = scmp.ne.s32.totalorder %s201, %s202
      %p211 = scmp.eq.s32.totalorder %s23, 0
      %p212 = por %p210, %p211
      %p213 = scmp.ne.s32.totalorder %s201, %s202
      %p214 = scmp.eq.s32.totalorder %s24, 1
      %p215 = por %p213, %p214
      %p217 = scmp.ne.s32.totalorder %s202, %s216
      %p218 = scmp.eq.s32.totalorder %s24, 0
      %p219 = por %p217, %p218
      %s220 = ssub.s32 %s18, %s25
      %p221 = scmp.eq.s32.totalorder %s220, 0
      %s223 = sadd.s32 %s222, 1
      %s224 = scalar_select %p221, %s222, %s223
      %p227 = pneg %p221
      %p228 = scmp.eq.s32.totalorder %s18, 1
      %p229 = por %p227, %p228
      %p230 = scmp.ne.s32.totalorder %s222, %s225
      %p231 = scmp.eq.s32.totalorder %s18, 0
      %p232 = por %p230, %p231
      %p233 = scmp.ne.s32.totalorder %s222, %s225
      %p234 = scmp.eq.s32.totalorder %s23, 1
      %p235 = por %p233, %p234
      %p236 = scmp.ne.s32.totalorder %s225, %s226
      %p237 = scmp.eq.s32.totalorder %s23, 0
      %p238 = por %p236, %p237
      %p239 = scmp.ne.s32.totalorder %s225, %s226
      %p240 = scmp.eq.s32.totalorder %s24, 1
      %p241 = por %p239, %p240
      %p243 = scmp.ne.s32.totalorder %s226, %s242
      %p244 = scmp.eq.s32.totalorder %s24, 0
      %p245 = por %p243, %p244
      %p246 = scmp.le.s32.totalorder 1, %s18
      %p247 = scmp.lt.s32.totalorder %s18, 3
      %p248 = pnand %p246, %p247
      %p249 = pneg %p248
      // Predicated region
      $region9: #{tpu_custom_call.1} parent=5 // pred_check
        _
      $region10: #{tpu_custom_call.1} parent=5 // pred_check_branch
        %251 = sbr.rel (%p248) target = $region12
      $region11: #{tpu_custom_call.1} parent=5 // pred_region
        %s252 = ssub.s32 %s18, 1
        // Predicated region
        $region13: #{tpu_custom_call.1} parent=11 // pred_check
          %p253 = pneg %p65
        $region14: #{tpu_custom_call.1} parent=11 // pred_check_branch
          %255 = sbr.rel (%p253) target = $region16
        $region15: #{tpu_custom_call.1} parent=11 // pred_region
          _
        $region16: #{tpu_custom_call.1} parent=11 // pred_fallthru
          _
        // Predicated region
        $region17: #{tpu_custom_call.1} parent=11 // pred_check
          %p256 = pneg %p86
        $region18: #{tpu_custom_call.1} parent=11 // pred_check_branch
          %258 = sbr.rel (%p256) target = $region20
        $region19: #{tpu_custom_call.1} parent=11 // pred_region
          _
        $region20: #{tpu_custom_call.1} parent=11 // pred_fallthru
          _
        // Predicated region
        $region21: #{tpu_custom_call.1} parent=11 // pred_check
          %p259 = pneg %p107
        $region22: #{tpu_custom_call.1} parent=11 // pred_check_branch
          %261 = sbr.rel (%p259) target = $region24
        $region23: #{tpu_custom_call.1} parent=11 // pred_region
          _
        $region24: #{tpu_custom_call.1} parent=11 // pred_fallthru
          _
        // Predicated region
        $region25: #{tpu_custom_call.1} parent=11 // pred_check
          %p262 = pneg %p128
        $region26: #{tpu_custom_call.1} parent=11 // pred_check_branch
          %264 = sbr.rel (%p262) target = $region28
        $region27: #{tpu_custom_call.1} parent=11 // pred_region
          _
        $region28: #{tpu_custom_call.1} parent=11 // pred_fallthru
          _
        // Predicated region
        $region29: #{tpu_custom_call.1} parent=11 // pred_check
          %p265 = pneg %p149
        $region30: #{tpu_custom_call.1} parent=11 // pred_check_branch
          %267 = sbr.rel (%p265) target = $region32
        $region31: #{tpu_custom_call.1} parent=11 // pred_region
          _
        $region32: #{tpu_custom_call.1} parent=11 // pred_fallthru
          _
        // Predicated region
        $region33: #{tpu_custom_call.1} parent=11 // pred_check
          %p268 = pneg %p170
        $region34: #{tpu_custom_call.1} parent=11 // pred_check_branch
          %270 = sbr.rel (%p268) target = $region36
        $region35: #{tpu_custom_call.1} parent=11 // pred_region
          _
        $region36: #{tpu_custom_call.1} parent=11 // pred_fallthru
          _
        // Predicated region
        $region37: #{tpu_custom_call.1} parent=11 // pred_check
          %p271 = pneg %p191
        $region38: #{tpu_custom_call.1} parent=11 // pred_check_branch
          %273 = sbr.rel (%p271) target = $region40
        $region39: #{tpu_custom_call.1} parent=11 // pred_region
          _
        $region40: #{tpu_custom_call.1} parent=11 // pred_fallthru
          _
        // Predicated region
        $region41: #{tpu_custom_call.1} parent=11 // pred_check
          %p274 = pneg %p212
        $region42: #{tpu_custom_call.1} parent=11 // pred_check_branch
          %276 = sbr.rel (%p274) target = $region44
        $region43: #{tpu_custom_call.1} parent=11 // pred_region
          _
        $region44: #{tpu_custom_call.1} parent=11 // pred_fallthru
          _
      $region12: #{tpu_custom_call.1} parent=5 // pred_fallthru
        _
      %p277 = scmp.lt.s32.totalorder %s18, 2
      // Predicated region
      $region45: #{tpu_custom_call.1} parent=5 // pred_check
        %p278 = pneg %p277
      $region46: #{tpu_custom_call.1} parent=5 // pred_check_branch
        %280 = sbr.rel (%p278) target = $region48
      $region47: #{tpu_custom_call.1} parent=5 // pred_region
        // Predicated region
        $region49: #{tpu_custom_call.1} parent=47 // pred_check
          %p281 = pneg %p38
        $region50: #{tpu_custom_call.1} parent=47 // pred_check_branch
          %283 = sbr.rel (%p281) target = $region52
        $region51: #{tpu_custom_call.1} parent=47 // pred_region
          %p284 = scmp.lt.s32.totalorder %s18, 1
          %s285 = scalar_select %p284, %s18, 1
          %s286 = smul.addr %s285, 2
          %s287 = smul.addr %s286, 4
          %s288 = scalar_lea.vmem %s0, %s287
        $region52: #{tpu_custom_call.1} parent=47 // pred_fallthru
          _
      $region48: #{tpu_custom_call.1} parent=5 // pred_fallthru
        _
      %p289 = scmp.le.s32.totalorder 1, %s18
      %p290 = scmp.lt.s32.totalorder %s18, 3
      %p291 = pnand %p289, %p290
      %p292 = pneg %p291
      // Predicated region
      $region53: #{tpu_custom_call.1} parent=5 // pred_check
        _
      $region54: #{tpu_custom_call.1} parent=5 // pred_check_branch
        %294 = sbr.rel (%p291) target = $region56
      $region55: #{tpu_custom_call.1} parent=5 // pred_region
        %s295 = ssub.s32 %s18, 1
        %p296 = scmp.lt.s32.totalorder %s23, 1
        %s297 = scalar_select %p296, %s23, 1
        %s298 = smul.addr %s297, 2
        %s299 = smul.addr %s298, 4
        %s300 = scalar_lea.vmem %s0, %s299
        %p301 = pneg %p44
        %p302 = pneg %p41
        %p303 = pneg %p65
        %p304 = pneg %p62
        %p305 = pneg %p86
        %p306 = pneg %p83
        %p307 = pneg %p107
        %p308 = pneg %p104
        %p309 = pneg %p128
        %p310 = pneg %p125
        %p311 = pneg %p149
        %p312 = pneg %p146
        %p313 = pneg %p170
        %p314 = pneg %p167
        %p315 = pneg %p191
        %p316 = pneg %p188
        %p317 = pneg %p212
        %p318 = pneg %p209
        %p319 = pneg %p238
        %p320 = pneg %p235
        %s321 = sand.u32 %s225, 1
        %s322 = scalar_lea.sflag [#allocation7], %s321
        %s323 = sand.u32 %s225, 1
        %s324 = smul.addr %s323, 16
        %s325 = scalar_lea.vmem [#allocation6], %s324
        %p326 = scmp.lt.s32.totalorder %s23, 1
        %s327 = scalar_select %p326, %s23, 1
        %s328 = smul.addr %s327, 2
        %s329 = smul.addr %s328, 4
        %s330 = scalar_lea.vmem %s0, %s329
        %v332 = vld [vmem:[%s1] sm:$0x3]
        %v333 = vld [vmem:[%s2] sm:$0x3]
        %v334 = vld [vmem:[%s330] sm:$0xff]
        %v336 = vcombine.high %v334, %v334
        %v338 = vpack.c.bf16 %v334, %v334
        %v339 = vpack.c.bf16 %v336, %v336
        %vm340 = vcmask 1042296
        %341 = vst.msk [vmem:[#allocation2] sm:$0x3] %vm340, 0
        %vm342 = vcmask 132096
        %343 = vst.msk [vmem:[#allocation2 + $0x6] sm:$0x3] %vm342, 0
        %v346 = vcombine.low %v338, %v339
        %v348 = vunpack.c.l.s4 1983009808
        %v349 = vunpack.c.0.s8 %v348
        %v350 = vlaneseq
        %v351 = vshrl.u32 %v350, 7
        %v352 = vsub.s32 %v349, %v351
        %v353 = vrot.slane %v346, %v352
        %355 = vst [vmem:[#allocation2 + $0x2] sm:$0xf] %v353
        %v356 = vld [vmem:[#allocation2] sm:$0xff]
        %v359 = vunpack.c.l.s4 1966171168
        %v360 = vunpack.c.0.s8 %v359
        %v361 = vlaneseq
        %v362 = vshrl.u32 %v361, 7
        %v363 = vsub.s32 %v360, %v362
        %v364 = vrot.slane %v332, %v363
        %v365 = vcombine.high %v364, %v364
        %v367 = vunpack.c.l.s4 1966171168
        %v368 = vunpack.c.0.s8 %v367
        %v369 = vlaneseq
        %v370 = vshrl.u32 %v369, 7
        %v371 = vsub.s32 %v368, %v370
        %v372 = vrot.slane %v364, %v371
        %v374 = vunpack.c.l.s4 1966171168
        %v375 = vunpack.c.0.s8 %v374
        %v376 = vlaneseq
        %v377 = vshrl.u32 %v376, 7
        %v378 = vsub.s32 %v375, %v377
        %v379 = vrot.slane %v365, %v378
        %v381 = vpack.i.b16 %v372, %v372
        %v383 = vlaneseq
        %v384 = vshrl.u32 %v383, 7
        %v385 = vsub.s32 0, %v384
        %v386 = vrot.slane %v381, %v385
        %v388 = vpack.i.b16 %v379, %v379
        %v390 = vlaneseq
        %v391 = vshrl.u32 %v390, 7
        %v392 = vsub.s32 0, %v391
        %v393 = vrot.slane %v388, %v392
        %v396 = vcombine.low %v386, %v393
        %v398 = vunpack.c.l.s4 1983009808
        %v399 = vunpack.c.0.s8 %v398
        %v400 = vlaneseq
        %v401 = vshrl.u32 %v400, 7
        %v402 = vsub.s32 %v399, %v401
        %v403 = vrot.slane %v396, %v402
        %404 = vrot.lane.b32.xlu0 %v403, 111
        %v405 = vpop.permute.xlu0 %404
        %v406 = vrot.slane %v405, 6
        %vm407 = vcmask 908288
        %v408 = vsel %vm407, %v406, %v405
        %v410 = vmul.bf16 %v356, %v408
        %v412 = vcombine.high %v410, %v410
        %v414 = vunpack.c.l.s4 1983009808
        %v415 = vunpack.c.0.s8 %v414
        %v416 = vlaneseq
        %v417 = vshrl.u32 %v416, 7
        %v418 = vsub.s32 %v415, %v417
        %v419 = vrot.slane %v410, %v418
        %v421 = vunpack.c.l.s4 1983009808
        %v422 = vunpack.c.0.s8 %v421
        %v423 = vlaneseq
        %v424 = vshrl.u32 %v423, 7
        %v425 = vsub.s32 %v422, %v424
        %v426 = vrot.slane %v412, %v425
        %427 = vrot.lane.b32.xlu0 %v419, 17
        %v428 = vpop.permute.xlu0 %427
        %429 = vrot.lane.b32.xlu0 %v426, 17
        %v430 = vpop.permute.xlu0 %429
        %v431 = vrot.slane %v428, 4
        %v432 = vrot.slane %v430, 4
        %vm433 = vcmask 1043456
        %v434 = vsel %vm433, %v431, %v432
        %vm435 = vcmask 138240
        %v436 = vsel %vm435, %v428, %v434
        %438 = vst [vmem:[#allocation3] sm:$0x33] %v436
        %v440 = vcombine.low %v356, %v356
        %v442 = vunpack.c.l.s4 1983009808
        %v443 = vunpack.c.0.s8 %v442
        %v444 = vlaneseq
        %v445 = vshrl.u32 %v444, 7
        %v446 = vsub.s32 %v443, %v445
        %v447 = vrot.slane %v440, %v446
        %v449 = vunpack.c.l.s4 1983009808
        %v450 = vunpack.c.0.s8 %v449
        %v451 = vlaneseq
        %v452 = vshrl.u32 %v451, 7
        %v453 = vsub.s32 %v450, %v452
        %v454 = vrot.slane %v356, %v453
        %455 = vrot.lane.b32.xlu0 %v447, 16
        %v456 = vpop.permute.xlu0 %455
        %457 = vrot.lane.b32.xlu0 %v454, 16
        %v458 = vpop.permute.xlu0 %457
        %v459 = vrot.slane %v456, 4
        %v460 = vrot.slane %v458, 4
        %v461 = vsel %vm433, %v459, %v460
        %vm462 = vcmask 130048
        %v463 = vsel %vm462, %v456, %v461
        %465 = vst [vmem:[#allocation3] sm:$0xcc] %v463
        %v468 = vunpack.c.l.s4 1966171168
        %v469 = vunpack.c.0.s8 %v468
        %v470 = vlaneseq
        %v471 = vshrl.u32 %v470, 7
        %v472 = vsub.s32 %v469, %v471
        %v473 = vrot.slane %v333, %v472
        %v474 = vcombine.high %v473, %v473
        %v476 = vunpack.c.l.s4 1966171168
        %v477 = vunpack.c.0.s8 %v476
        %v478 = vlaneseq
        %v479 = vshrl.u32 %v478, 7
        %v480 = vsub.s32 %v477, %v479
        %v481 = vrot.slane %v473, %v480
        %v483 = vunpack.c.l.s4 1966171168
        %v484 = vunpack.c.0.s8 %v483
        %v485 = vlaneseq
        %v486 = vshrl.u32 %v485, 7
        %v487 = vsub.s32 %v484, %v486
        %v488 = vrot.slane %v474, %v487
        %v490 = vpack.i.b16 %v481, %v481
        %v492 = vlaneseq
        %v493 = vshrl.u32 %v492, 7
        %v494 = vsub.s32 0, %v493
        %v495 = vrot.slane %v490, %v494
        %v497 = vpack.i.b16 %v488, %v488
        %v499 = vlaneseq
        %v500 = vshrl.u32 %v499, 7
        %v501 = vsub.s32 0, %v500
        %v502 = vrot.slane %v497, %v501
        %v505 = vcombine.low %v495, %v502
        %v507 = vunpack.c.l.s4 1983009808
        %v508 = vunpack.c.0.s8 %v507
        %v509 = vlaneseq
        %v510 = vshrl.u32 %v509, 7
        %v511 = vsub.s32 %v508, %v510
        %v512 = vrot.slane %v505, %v511
        %513 = vrot.lane.b32.xlu0 %v512, 113
        %v514 = vpop.permute.xlu0 %513
        %v515 = vrot.slane %v514, 6
        %vm516 = vcmask 924672
        %v517 = vsel %vm516, %v515, %v514
        %v519 = vmul.bf16 %v356, %v517
        %v521 = vcombine.high %v519, %v519
        %v523 = vunpack.c.l.s4 1983009808
        %v524 = vunpack.c.0.s8 %v523
        %v525 = vlaneseq
        %v526 = vshrl.u32 %v525, 7
        %v527 = vsub.s32 %v524, %v526
        %v528 = vrot.slane %v519, %v527
        %v530 = vunpack.c.l.s4 1983009808
        %v531 = vunpack.c.0.s8 %v530
        %v532 = vlaneseq
        %v533 = vshrl.u32 %v532, 7
        %v534 = vsub.s32 %v531, %v533
        %v535 = vrot.slane %v521, %v534
        %536 = vrot.lane.b32.xlu0 %v528, 15
        %v537 = vpop.permute.xlu0 %536
        %538 = vrot.lane.b32.xlu0 %v535, 15
        %v539 = vpop.permute.xlu0 %538
        %v540 = vrot.slane %v537, 4
        %v541 = vrot.slane %v539, 4
        %v542 = vsel %vm433, %v540, %v541
        %vm543 = vcmask 121856
        %v544 = vsel %vm543, %v537, %v542
        %546 = vst [vmem:[#allocation3 + $0x8] sm:$0x33] %v544
        %547 = vrot.lane.b32.xlu0 %v403, 127
        %v548 = vpop.permute.xlu0 %547
        %v549 = vrot.slane %v548, 6
        %vm550 = vcmask 1039360
        %v551 = vsel %vm550, %v549, %v548
        %v553 = vmul.bf16 %v356, %v551
        %v555 = vcombine.low %v553, %v553
        %v557 = vunpack.c.l.s4 1983009808
        %v558 = vunpack.c.0.s8 %v557
        %v559 = vlaneseq
        %v560 = vshrl.u32 %v559, 7
        %v561 = vsub.s32 %v558, %v560
        %v562 = vrot.slane %v555, %v561
        %v564 = vunpack.c.l.s4 1983009808
        %v565 = vunpack.c.0.s8 %v564
        %v566 = vlaneseq
        %v567 = vshrl.u32 %v566, 7
        %v568 = vsub.s32 %v565, %v567
        %v569 = vrot.slane %v553, %v568
        %570 = vrot.lane.b32.xlu0 %v562, 1
        %v571 = vpop.permute.xlu0 %570
        %572 = vrot.lane.b32.xlu0 %v569, 1
        %v573 = vpop.permute.xlu0 %572
        %v574 = vrot.slane %v571, 4
        %v575 = vrot.slane %v573, 4
        %v576 = vsel %vm433, %v574, %v575
        %vm577 = vcmask 7168
        %v578 = vsel %vm577, %v571, %v576
        %580 = vst [vmem:[#allocation3 + $0x8] sm:$0xcc] %v578
        %v581 = vcombine.high %v356, %v356
        %v583 = vunpack.c.l.s4 1983009808
        %v584 = vunpack.c.0.s8 %v583
        %v585 = vlaneseq
        %v586 = vshrl.u32 %v585, 7
        %v587 = vsub.s32 %v584, %v586
        %v588 = vrot.slane %v581, %v587
        %v589 = vrot.slane %v454, 4
        %v590 = vrot.slane %v588, 4
        %v591 = vsel %vm433, %v589, %v590
        %593 = vst [vmem:[#allocation3 + $0x10] sm:$0x33] %v591
        %594 = vrot.lane.b32.xlu0 %v356, 127
        %v595 = vpop.permute.xlu0 %594
        %v596 = vrot.slane %v595, 2
        %v597 = vrot.slane %v595, 4
        %v598 = vsel %vm550, %v596, %v597
        %v601 = vmul.bf16 %v598, %v512
        %v603 = vcombine.low %v601, %v601
        %v605 = vunpack.c.l.s4 1983009808
        %v606 = vunpack.c.0.s8 %v605
        %v607 = vlaneseq
        %v608 = vshrl.u32 %v607, 7
        %v609 = vsub.s32 %v606, %v608
        %v610 = vrot.slane %v603, %v609
        %612 = vst [vmem:[#allocation3 + $0x10] sm:$0xcc] %v610
        %613 = vrot.lane.b32.xlu0 %v356, 113
        %v614 = vpop.permute.xlu0 %613
        %v615 = vrot.slane %v614, 2
        %v616 = vrot.slane %v614, 4
        %v617 = vsel %vm516, %v615, %v616
        %v620 = vmul.bf16 %v617, %v403
        %v623 = vunpack.c.l.s4 1983009808
        %v624 = vunpack.c.0.s8 %v623
        %v625 = vlaneseq
        %v626 = vshrl.u32 %v625, 7
        %v627 = vsub.s32 %v624, %v626
        %v628 = vrot.slane %v620, %v627
        %630 = vst [vmem:[#allocation3 + $0x18] sm:$0x33] %v628
        %631 = vrot.lane.b32.xlu0 %v447, 112
        %v632 = vpop.permute.xlu0 %631
        %633 = vrot.lane.b32.xlu0 %v454, 112
        %v634 = vpop.permute.xlu0 %633
        %v635 = vrot.slane %v632, 4
        %v636 = vrot.slane %v634, 4
        %v637 = vsel %vm433, %v635, %v636
        %vm638 = vcmask 916480
        %v639 = vsel %vm638, %v637, %v634
        %641 = vst [vmem:[#allocation3 + $0x18] sm:$0xcc] %v639
        %642 = vrot.lane.b32.xlu0 %v356, 111
        %v643 = vpop.permute.xlu0 %642
        %v644 = vrot.slane %v643, 2
        %v645 = vrot.slane %v643, 4
        %v646 = vsel %vm407, %v644, %v645
        %v648 = vmul.bf16 %v646, %v512
        %v651 = vunpack.c.l.s4 1983009808
        %v652 = vunpack.c.0.s8 %v651
        %v653 = vlaneseq
        %v654 = vshrl.u32 %v653, 7
        %v655 = vsub.s32 %v652, %v654
        %v656 = vrot.slane %v648, %v655
        %658 = vst [vmem:[#allocation3 + $0x20] sm:$0x33] %v656
        %v659 = vld [vmem:[%s3] sm:$0xf]
        %v660 = vld [vmem:[#allocation3] sm:$0xff]
        %v661 = vld [vmem:[#allocation3 + $0x8] sm:$0xff]
        %v662 = vld [vmem:[#allocation3 + $0x10] sm:$0xff]
        %v663 = vld [vmem:[#allocation3 + $0x18] sm:$0xff]
        %v664 = vld [vmem:[#allocation3 + $0x20] sm:$0x33]
        %v670 = vunpack.c.l.b16 %v660
        %v671 = vunpack.c.h.b16 %v660
        %v672 = vunpack.c.l.b16 %v661
        %v673 = vunpack.c.h.b16 %v661
        %v674 = vunpack.c.l.b16 %v662
        %v675 = vunpack.c.h.b16 %v662
        %v676 = vunpack.c.l.b16 %v663
        %v677 = vunpack.c.h.b16 %v663
        %v678 = vunpack.c.l.b16 %v664
        %v679 = vunpack.c.h.b16 %v664
        %v680 = vpack.c.b16 %v672, %v670
        %v681 = vpack.c.b16 %v673, %v671
        %v682 = vpack.c.b16 %v676, %v674
        %v683 = vpack.c.b16 %v677, %v675
        %v684 = vpack.c.b16 %v678, %v678
        %v685 = vpack.c.b16 %v679, %v679
        %vm690 = vcmask 293888
        %v692 = vsel %vm690, %v659, 0
        %vm694 = vcmask 1041408
        %v696 = vsel %vm694, %v684, 0
        %v699 = vsel %vm694, %v685, 0
        %701 = vmatprep.subr.bf16.mxu0 %v681
        %702 = vmatpush1.bf16.msra.mxu0 %v680
        %703 = vmatprep.subr.bf16.mxu0 %v683
        %704 = vmatpush1.bf16.msra.mxu0 %v682
        %705 = vmatprep.subr.bf16.mxu0 %v699
        %706 = vmatpush1.bf16.msra.mxu0 %v696
        %707 = vmatprep.subr.bf16.mxu0 0
        %708 = vmatpush1.bf16.msra.mxu0 0
        %709 = vmatprep.subr.bf16.mxu0 0
        %710 = vmatpush1.bf16.msra.mxu0 0
        %711 = vmatprep.subr.bf16.mxu0 0
        %712 = vmatpush1.bf16.msra.mxu0 0
        %713 = vmatprep.subr.bf16.mxu0 0
        %714 = vmatpush1.bf16.msra.mxu0 0
        %715 = vmatprep.subr.bf16.mxu0 0
        %716 = vmatpush1.bf16.msra.mxu0 0
        %717 = vmatprep.subr.bf16.mxu0 0
        %718 = vmatpush1.bf16.msra.mxu0 0
        %719 = vmatprep.subr.bf16.mxu0 0
        %720 = vmatpush1.bf16.msra.mxu0 0
        %721 = vmatprep.subr.bf16.mxu0 0
        %722 = vmatpush1.bf16.msra.mxu0 0
        %723 = vmatprep.subr.bf16.mxu0 0
        %724 = vmatpush1.bf16.msra.mxu0 0
        %725 = vmatprep.subr.bf16.mxu0 0
        %726 = vmatpush1.bf16.msra.mxu0 0
        %727 = vmatprep.subr.bf16.mxu0 0
        %728 = vmatpush1.bf16.msra.mxu0 0
        %729 = vmatprep.subr.bf16.mxu0 0
        %730 = vmatpush1.bf16.msra.mxu0 0
        %731 = vmatprep.subr.bf16.mxu0 0
        %732 = vmatpush1.bf16.msra.mxu0 0
        %733 = vmatprep.mubr.bf16.mxu0 0
        %734 = vmatmul.mubr.bf16.gmra.mrb[0].mxu0 %v692
        %v735 = vpop.f32.mrb[0].mxu0
        %v736 = vadd.f32 0.0, %v735
        %v737 = vpop.f32.mrb[0].mxu0
        %v738 = vadd.f32 0.0, %v737
        %v739 = vpop.f32.mrb[0].mxu0
        %v740 = vpop.f32.mrb[0].mxu0
        %741 = vdwg.mxu0
        %v742 = vld [vmem:[%s4] sm:$0xff]
        %744 = vset.pattern.permute.xlu0 0
        %745 = vperm.xlu0 %744, %v742
        %v746 = vpop.permute.xlu0 %745
        %v748 = vmul.f32 %v736, %v746
        %v749 = vmul.f32 %v738, %v746
        %v750 = vld [vmem:[%s5] sm:$0xff]
        %752 = vset.pattern.permute.xlu0 0
        %753 = vperm.xlu0 %752, %v750
        %v754 = vpop.permute.xlu0 %753
        %v756 = vadd.f32 %v748, %v754
        %v757 = vadd.f32 %v749, %v754
        %v758 = vmax.f32 %v756, 0.0
        %v759 = vmax.f32 %v757, 0.0
        %v760 = vpack.c.bf16 %v758, %v758
        %v761 = vpack.c.bf16 %v759, %v759
        %vm762 = vcmask 1044344
        %763 = vst.msk [vmem:[#allocation4] sm:$0xf] %vm762, 0
        %vm764 = vcmask 134144
        %765 = vst.msk [vmem:[#allocation4 + $0xc] sm:$0xf] %vm764, 0
        %v768 = vunpack.c.l.b16 %v760
        %v769 = vunpack.c.l.b16 %v761
        %v770 = vpack.c.b16 %v769, %v768
        %772 = vst [vmem:[#allocation4 + $0x4] sm:$0xff] %v770
        %v773 = vld [vmem:[#allocation4] sm:$0xff]
        %v774 = vld [vmem:[#allocation4 + $0x8] sm:$0xff]
        %v775 = vunpack.c.l.b16 %v386
        %v776 = vunpack.c.l.b16 %v393
        %v777 = vpack.c.b16 %v776, %v775
        %778 = vrot.lane.b32.xlu0 %v777, 111
        %v779 = vpop.permute.xlu0 %778
        %v780 = vrot.slane %v779, 4
        %v781 = vsel %vm407, %v780, %v779
        %v784 = vmul.bf16 %v773, %v781
        %v785 = vmul.bf16 %v774, %v780
        %788 = vrot.lane.b32.xlu0 %v784, 17
        %v789 = vpop.permute.xlu0 %788
        %790 = vrot.lane.b32.xlu0 %v785, 17
        %v791 = vpop.permute.xlu0 %790
        %v792 = vrot.slane %v789, 4
        %v793 = vrot.slane %v791, 4
        %v794 = vsel %vm433, %v792, %v793
        %v795 = vsel %vm435, %v789, %v794
        %797 = vst [vmem:[#allocation5] sm:$0xff] %v795
        %800 = vrot.lane.b32.xlu0 %v773, 16
        %v801 = vpop.permute.xlu0 %800
        %802 = vrot.lane.b32.xlu0 %v774, 16
        %v803 = vpop.permute.xlu0 %802
        %v804 = vrot.slane %v801, 4
        %v805 = vrot.slane %v803, 4
        %v806 = vsel %vm433, %v804, %v805
        %v807 = vsel %vm462, %v801, %v806
        %809 = vst [vmem:[#allocation5 + $0x8] sm:$0xff] %v807
        %v810 = vunpack.c.l.b16 %v495
        %v811 = vunpack.c.l.b16 %v502
        %v812 = vpack.c.b16 %v811, %v810
        %813 = vrot.lane.b32.xlu0 %v812, 113
        %v814 = vpop.permute.xlu0 %813
        %v815 = vrot.slane %v814, 4
        %v816 = vsel %vm516, %v815, %v814
        %v819 = vmul.bf16 %v773, %v816
        %v820 = vmul.bf16 %v774, %v815
        %823 = vrot.lane.b32.xlu0 %v819, 15
        %v824 = vpop.permute.xlu0 %823
        %825 = vrot.lane.b32.xlu0 %v820, 15
        %v826 = vpop.permute.xlu0 %825
        %v827 = vrot.slane %v824, 4
        %v828 = vrot.slane %v826, 4
        %v829 = vsel %vm433, %v827, %v828
        %v830 = vsel %vm543, %v824, %v829
        %832 = vst [vmem:[#allocation5 + $0x10] sm:$0xff] %v830
        %833 = vrot.lane.b32.xlu0 %v777, 127
        %v834 = vpop.permute.xlu0 %833
        %v835 = vrot.slane %v834, 4
        %v836 = vsel %vm550, %v835, %v834
        %v839 = vmul.bf16 %v773, %v836
        %v840 = vmul.bf16 %v774, %v835
        %843 = vrot.lane.b32.xlu0 %v839, 1
        %v844 = vpop.permute.xlu0 %843
        %845 = vrot.lane.b32.xlu0 %v840, 1
        %v846 = vpop.permute.xlu0 %845
        %v847 = vrot.slane %v844, 4
        %v848 = vrot.slane %v846, 4
        %v849 = vsel %vm433, %v847, %v848
        %v850 = vsel %vm577, %v844, %v849
        %852 = vst [vmem:[#allocation5 + $0x18] sm:$0xff] %v850
        %v853 = vrot.slane %v773, 4
        %v854 = vrot.slane %v774, 4
        %v855 = vsel %vm433, %v853, %v854
        %857 = vst [vmem:[#allocation5 + $0x20] sm:$0xff] %v855
        %858 = vrot.lane.b32.xlu0 %v773, 127
        %v859 = vpop.permute.xlu0 %858
        %860 = vrot.lane.b32.xlu0 %v774, 127
        %v861 = vpop.permute.xlu0 %860
        %v862 = vrot.slane %v859, 4
        %v863 = vrot.slane %v861, 4
        %v864 = vsel %vm433, %v862, %v863
        %v865 = vsel %vm550, %v864, %v861
        %v868 = vmul.bf16 %v865, %v812
        %869 = vst [vmem:[#allocation5 + $0x28] sm:$0xff] %v868
        %870 = vrot.lane.b32.xlu0 %v773, 113
        %v871 = vpop.permute.xlu0 %870
        %872 = vrot.lane.b32.xlu0 %v774, 113
        %v873 = vpop.permute.xlu0 %872
        %v874 = vrot.slane %v871, 4
        %v875 = vrot.slane %v873, 4
        %v876 = vsel %vm433, %v874, %v875
        %v877 = vsel %vm516, %v876, %v873
        %v880 = vmul.bf16 %v877, %v777
        %881 = vst [vmem:[#allocation5 + $0x30] sm:$0xff] %v880
        %882 = vrot.lane.b32.xlu0 %v773, 112
        %v883 = vpop.permute.xlu0 %882
        %884 = vrot.lane.b32.xlu0 %v774, 112
        %v885 = vpop.permute.xlu0 %884
        %v886 = vrot.slane %v883, 4
        %v887 = vrot.slane %v885, 4
        %v888 = vsel %vm433, %v886, %v887
        %v889 = vsel %vm638, %v888, %v885
        %891 = vst [vmem:[#allocation5 + $0x38] sm:$0xff] %v889
        %892 = vrot.lane.b32.xlu0 %v773, 111
        %v893 = vpop.permute.xlu0 %892
        %894 = vrot.lane.b32.xlu0 %v774, 111
        %v895 = vpop.permute.xlu0 %894
        %v896 = vrot.slane %v893, 4
        %v897 = vrot.slane %v895, 4
        %v898 = vsel %vm433, %v896, %v897
        %v899 = vsel %vm407, %v898, %v895
        %v901 = vmul.bf16 %v899, %v812
        %902 = vst [vmem:[#allocation5 + $0x40] sm:$0xff] %v901
        %v903 = vld [vmem:[%s6] sm:$0xf]
        %v904 = vld [vmem:[#allocation5] sm:$0xff]
        %v905 = vld [vmem:[#allocation5 + $0x8] sm:$0xff]
        %v906 = vld [vmem:[#allocation5 + $0x10] sm:$0xff]
        %v907 = vld [vmem:[#allocation5 + $0x18] sm:$0xff]
        %v908 = vld [vmem:[#allocation5 + $0x20] sm:$0xff]
        %v909 = vld [vmem:[#allocation5 + $0x28] sm:$0xff]
        %v910 = vld [vmem:[#allocation5 + $0x30] sm:$0xff]
        %v911 = vld [vmem:[#allocation5 + $0x38] sm:$0xff]
        %v912 = vld [vmem:[#allocation5 + $0x40] sm:$0xff]
        %v922 = vunpack.c.l.b16 %v904
        %v923 = vunpack.c.h.b16 %v904
        %v924 = vunpack.c.l.b16 %v905
        %v925 = vunpack.c.h.b16 %v905
        %v926 = vunpack.c.l.b16 %v906
        %v927 = vunpack.c.h.b16 %v906
        %v928 = vunpack.c.l.b16 %v907
        %v929 = vunpack.c.h.b16 %v907
        %v930 = vunpack.c.l.b16 %v908
        %v931 = vunpack.c.h.b16 %v908
        %v932 = vunpack.c.l.b16 %v909
        %v933 = vunpack.c.h.b16 %v909
        %v934 = vunpack.c.l.b16 %v910
        %v935 = vunpack.c.h.b16 %v910
        %v936 = vunpack.c.l.b16 %v911
        %v937 = vunpack.c.h.b16 %v911
        %v938 = vunpack.c.l.b16 %v912
        %v939 = vunpack.c.h.b16 %v912
        %v940 = vpack.c.b16 %v924, %v922
        %v941 = vpack.c.b16 %v925, %v923
        %v942 = vpack.c.b16 %v928, %v926
        %v943 = vpack.c.b16 %v929, %v927
        %v944 = vpack.c.b16 %v932, %v930
        %v945 = vpack.c.b16 %v933, %v931
        %v946 = vpack.c.b16 %v936, %v934
        %v947 = vpack.c.b16 %v937, %v935
        %v948 = vpack.c.b16 %v938, %v938
        %v949 = vpack.c.b16 %v939, %v939
        %vm958 = vcmask 588800
        %v960 = vsel %vm958, %v903, 0
        %vm962 = vcmask 1043456
        %v964 = vsel %vm962, %v948, 0
        %v967 = vsel %vm962, %v949, 0
        %969 = vmatprep.subr.bf16.mxu0 %v941
        %970 = vmatpush1.bf16.msra.mxu0 %v940
        %971 = vmatprep.subr.bf16.mxu0 %v943
        %972 = vmatpush1.bf16.msra.mxu0 %v942
        %973 = vmatprep.subr.bf16.mxu0 %v945
        %974 = vmatpush1.bf16.msra.mxu0 %v944
        %975 = vmatprep.subr.bf16.mxu0 %v947
        %976 = vmatpush1.bf16.msra.mxu0 %v946
        %977 = vmatprep.subr.bf16.mxu0 %v967
        %978 = vmatpush1.bf16.msra.mxu0 %v964
        %979 = vmatprep.subr.bf16.mxu0 0
        %980 = vmatpush1.bf16.msra.mxu0 0
        %981 = vmatprep.subr.bf16.mxu0 0
        %982 = vmatpush1.bf16.msra.mxu0 0
        %983 = vmatprep.subr.bf16.mxu0 0
        %984 = vmatpush1.bf16.msra.mxu0 0
        %985 = vmatprep.subr.bf16.mxu0 0
        %986 = vmatpush1.bf16.msra.mxu0 0
        %987 = vmatprep.subr.bf16.mxu0 0
        %988 = vmatpush1.bf16.msra.mxu0 0
        %989 = vmatprep.subr.bf16.mxu0 0
        %990 = vmatpush1.bf16.msra.mxu0 0
        %991 = vmatprep.subr.bf16.mxu0 0
        %992 = vmatpush1.bf16.msra.mxu0 0
        %993 = vmatprep.subr.bf16.mxu0 0
        %994 = vmatpush1.bf16.msra.mxu0 0
        %995 = vmatprep.subr.bf16.mxu0 0
        %996 = vmatpush1.bf16.msra.mxu0 0
        %997 = vmatprep.subr.bf16.mxu0 0
        %998 = vmatpush1.bf16.msra.mxu0 0
        %999 = vmatprep.subr.bf16.mxu0 0
        %1000 = vmatpush1.bf16.msra.mxu0 0
        %1001 = vmatprep.mubr.bf16.mxu0 0
        %1002 = vmatmul.mubr.bf16.gmra.mrb[0].mxu0 %v960
        %v1003 = vpop.f32.mrb[0].mxu0
        %v1004 = vadd.f32 0.0, %v1003
        %v1005 = vpop.f32.mrb[0].mxu0
        %v1006 = vadd.f32 0.0, %v1005
        %v1007 = vpop.f32.mrb[0].mxu0
        %v1008 = vpop.f32.mrb[0].mxu0
        %1009 = vdwg.mxu0
        %v1010 = vld [vmem:[%s7] sm:$0xff]
        %1012 = vset.pattern.permute.xlu0 0
        %1013 = vperm.xlu0 %1012, %v1010
        %v1014 = vpop.permute.xlu0 %1013
        %v1016 = vmul.f32 %v1004, %v1014
        %v1017 = vmul.f32 %v1006, %v1014
        %v1018 = vld [vmem:[%s8] sm:$0xff]
        %1020 = vset.pattern.permute.xlu0 0
        %1021 = vperm.xlu0 %1020, %v1018
        %v1022 = vpop.permute.xlu0 %1021
        %v1024 = vadd.f32 %v1016, %v1022
        %v1025 = vadd.f32 %v1017, %v1022
        %v1026 = vmax.f32 %v1024, 0.0
        %v1027 = vmax.f32 %v1025, 0.0
        %1028 = vst [vmem:[%s325] sm:$0xff] %v1026
        %1029 = vst [vmem:[%s325 + $0x8] sm:$0xff] %v1027
        %s1030 = sand.u32 %s225, 1
        %s1031 = scalar_lea.sflag [#allocation7], %s1030
        %s1032 = sand.u32 %s225, 1
        %s1033 = smul.addr %s1032, 16
        %s1034 = scalar_lea.vmem [#allocation6], %s1033
        // Predicated region
        $region57: #{tpu_custom_call.1} parent=55 // pred_check
          %p1035 = pneg %p235
        $region58: #{tpu_custom_call.1} parent=55 // pred_check_branch
          %1037 = sbr.rel (%p1035) target = $region60
        $region59: #{tpu_custom_call.1} parent=55 // pred_region
          %s1039 = ssub.s32 256, 256
          %1040 = vsyncadd %s1031, %s1039
          %s1041 = smul.addr %s23, 2
          %s1042 = smul.addr %s1041, 128
          %s1043 = scalar_lea.hbm %s9, %s1042
          %s1045 = sshll.u32 %s1034, 4
          %s1046 = int_to_ptr.vmem [resolvable:$true] %s1045
          %1048 = dma.vmem_to_hbm [thread:$0]  %s1046, 256, %s1043, %s1031
        $region60: #{tpu_custom_call.1} parent=55 // pred_fallthru
          _
      $region56: #{tpu_custom_call.1} parent=5 // pred_fallthru
        _
      %p1049 = scmp.le.s32.totalorder 2, %s18
      // Predicated region
      $region61: #{tpu_custom_call.1} parent=5 // pred_check
        %p1050 = pneg %p1049
      $region62: #{tpu_custom_call.1} parent=5 // pred_check_branch
        %1052 = sbr.rel (%p1050) target = $region64
      $region63: #{tpu_custom_call.1} parent=5 // pred_region
        %s1053 = ssub.s32 %s18, 2
        // Predicated region
        $region65: #{tpu_custom_call.1} parent=63 // pred_check
          %p1054 = pneg %p241
        $region66: #{tpu_custom_call.1} parent=63 // pred_check_branch
          %1056 = sbr.rel (%p1054) target = $region68
        $region67: #{tpu_custom_call.1} parent=63 // pred_region
          %s1057 = sand.u32 %s226, 1
          %s1058 = scalar_lea.sflag [#allocation7], %s1057
          %s1059 = sand.u32 %s226, 1
          %s1060 = smul.addr %s1059, 16
          %s1061 = scalar_lea.vmem [#allocation6], %s1060
          %1062 = dma.done %s1058, 256
        $region68: #{tpu_custom_call.1} parent=63 // pred_fallthru
          _
      $region64: #{tpu_custom_call.1} parent=5 // pred_fallthru
        _
    $region6: #{tpu_custom_call.1} parent=1 // loop_footer
      %s22 = sadd.s32 1, %s18
    $region7: #{tpu_custom_call.1} parent=1 // loop_footer_branch
      %17 = sbr.rel target = $region3
    $region8: #{tpu_custom_call.1} parent=1 // loop_exit
      _
    %1063 = vsyncpa [#allocation7], 1
    %s1064 = scalar_lea.sflag [#allocation7], 1
    %1065 = vsyncpa %s1064, 1

</llo_original>
